<compile_context>
chip_gen: v6e
topology: v6e:2x2x1
jax: 0.10.0
libtpu: 0.0.40
codegen_flags: <defaults>
</compile_context>

<pallas_src>
import jax
import jax.numpy as jnp
from jax.experimental import pallas as pl
from jax.experimental.pallas import tpu as pltpu


# ~4 MiB per block: amortizes the ~0.35 us / grid-step overhead and sits at
# the measured ~85% HBM-roofline plateau, while 4 double-buffered buffers
# (in + out) stay well inside v7x's 32 MiB scoped-VMEM default.
_TARGET_BLOCK_BYTES = 4 * 1024 * 1024
_MAX_LANE = 2048


def _copy_kernel(x_ref, o_ref):
    # Pure identity copy of a lane-dense (rows, lane) tile. All shape
    # plumbing (the (B, C, H, W) view) happens in the JAX wrapper.
    o_ref[...] = x_ref[...]


def _pick_lane_width(padded_total: int) -> int:
    """Largest multiple-of-128 divisor of padded_total, capped at _MAX_LANE."""
    for cand in range(_MAX_LANE, 127, -128):
        if padded_total % cand == 0:
            return cand
    return 128  # unreachable: padded_total is a multiple of 128


def _pick_row_tile(rows: int, lane: int, itemsize: int) -> int:
    """Divisor of `rows` that is a multiple of the packed-sublane count and
    keeps the block near _TARGET_BLOCK_BYTES (no partial / masked blocks)."""
    sub = {4: 8, 2: 16, 1: 32}.get(itemsize, 8)
    if rows <= sub or rows % sub != 0:
        # Full-extent rows is always a legal block shape.
        return rows
    row_bytes = lane * itemsize
    cap = max(sub, min(rows, (_TARGET_BLOCK_BYTES // row_bytes // sub) * sub))
    for r in range(cap, 0, -sub):
        if rows % r == 0:
            return r
    return rows


def _identity_copy_pallas(x2d: jax.Array) -> jax.Array:
    """Identity copy of a contiguous (B, N) array via a lane-dense Pallas
    pipeline over the flattened buffer (the epilogue-fusion form)."""
    b, n = x2d.shape
    total = b * n
    itemsize = jnp.dtype(x2d.dtype).itemsize

    flat = x2d.reshape(total)                 # metadata-only
    pad = (-total) % 128
    padded_total = total + pad
    if pad:
        # Keep the kernel's lane dim a clean multiple of 128 (no vst.msk).
        flat = jnp.pad(flat, (0, pad))

    lane = _pick_lane_width(padded_total)
    rows = padded_total // lane
    row_tile = _pick_row_tile(rows, lane, itemsize)

    block_bytes = row_tile * lane * itemsize
    # in + out, double-buffered (4 buffers) + headroom; never below 16 MiB,
    # never above what is safe on every generation (v7x physical = 64 MiB).
    vmem_limit = min(48 * 1024 * 1024,
                     max(16 * 1024 * 1024, 4 * block_bytes + (2 << 20)))

    slab = flat.reshape(rows, lane)           # metadata-only
    out = pl.pallas_call(
        _copy_kernel,
        out_shape=jax.ShapeDtypeStruct((rows, lane), x2d.dtype),
        grid=(rows // row_tile,),
        in_specs=[pl.BlockSpec((row_tile, lane), lambda i: (i, 0))],
        out_specs=pl.BlockSpec((row_tile, lane), lambda i: (i, 0)),
        compiler_params=pltpu.CompilerParams(
            dimension_semantics=("parallel",),
            vmem_limit_bytes=vmem_limit,
        ),
    )(slab)

    out_flat = out.reshape(padded_total)
    if pad:
        out_flat = out_flat[:total]
    return out_flat.reshape(b, n)


def unflatten(x: jax.Array, shape: tuple[int, int, int], *,
              force_pallas_copy: bool = False) -> jax.Array:
    """Pallas/JAX equivalent of UnFlatten(shape).forward(x).

    x: (B, N) with N == prod(shape). Returns (B, *shape), same dtype.

    Default path is a metadata-only reshape (zero HBM traffic), matching
    torch .view semantics exactly. `force_pallas_copy=True` routes the data
    through the Pallas identity-copy kernel (the epilogue-fusion form) for
    on-device validation.
    """
    b, n = x.shape
    c, h, w = shape
    assert n == c * h * w, "flat size must equal prod(shape)"

    if not force_pallas_copy:
        return x.reshape(b, c, h, w)          # free: metadata-only in XLA

    flat = _identity_copy_pallas(x)
    return flat.reshape(b, c, h, w)           # metadata-only split of N


if __name__ == "__main__":
    # Module target shape (C, H, W) = (4, 16, 16); batch B = 2.
    B, C, H, W = 2, 4, 16, 16
    key = jax.random.PRNGKey(0)
    x_flat = jax.random.normal(key, (B, C * H * W), dtype=jnp.float32)

    # Production path: free reshape.
    y_fast = jax.block_until_ready(unflatten(x_flat, (C, H, W)))

    # Pallas copy path (epilogue-fusion form): run once on-device to validate.
    y_copy = jax.block_until_ready(
        unflatten(x_flat, (C, H, W), force_pallas_copy=True))

    y_ref = x_flat.reshape(B, C, H, W)
    assert y_fast.shape == (B, C, H, W) and y_fast.dtype == x_flat.dtype
    assert y_copy.shape == (B, C, H, W) and y_copy.dtype == x_flat.dtype
    assert jnp.array_equal(y_fast, y_ref), "reshape path mismatch"
    assert jnp.array_equal(y_copy, y_ref), "Pallas copy path mismatch"

    print("KERNEL_OK")
</pallas_src>

<mosaic_0001>
module attributes {stable_mosaic.version = 11 : i64} {
  func.func @_copy_kernel(%arg0: i32, %arg1: memref<1x2048xf32, #tpu.memory_space<vmem>>, %arg2: memref<1x2048xf32, #tpu.memory_space<vmem>>) attributes {dimension_semantics = [#tpu.dimension_semantics<parallel>], iteration_bounds = array<i64: 1>, scalar_prefetch = 0 : i64, scratch_operands = 0 : i64, tpu.core_type = #tpu.core_type<tc>, window_params = [{transform_indices = @transform_0, window_bounds = array<i64: 1, 2048>}, {transform_indices = @transform_1, window_bounds = array<i64: 1, 2048>}]} {
    %c0 = arith.constant 0 : index
    %c0_0 = arith.constant 0 : index
    %0 = vector.load %arg1[%c0, %c0_0] : memref<1x2048xf32, #tpu.memory_space<vmem>>, vector<1x2048xf32>
    %c0_1 = arith.constant 0 : index
    %c0_2 = arith.constant 0 : index
    %1 = vector.load %arg2[%c0_1, %c0_2] : memref<1x2048xf32, #tpu.memory_space<vmem>>, vector<1x2048xf32>
    tpu.vector_store %arg2[%c0_1, %c0_2], %0 {strides = array<i32>} : memref<1x2048xf32, #tpu.memory_space<vmem>>, vector<1x2048xf32>,
    return
  }
  func.func @transform_0(%arg0: i32) -> (i32, i32) {
    %c0_i32 = arith.constant 0 : i32
    %c0_i32_0 = arith.constant 0 : i32
    return %arg0, %c0_i32 : i32, i32
  }
  func.func @transform_1(%arg0: i32) -> (i32, i32) {
    %c0_i32 = arith.constant 0 : i32
    %c0_i32_0 = arith.constant 0 : i32
    return %arg0, %c0_i32 : i32, i32
  }
}

</mosaic_0001>

<llo_original>
// kernel: tpu_custom_call.1
$region0: #{tpu_custom_call.1}
  #allocation0 [shape = 'u32[]', space=smem, size = 0x4, offset = 0x4, fixed_abs, tag = 'smem constant byte address 0x4 - core index']
  #allocation1 [shape = 'u32[144,128]{1,0:T(1,128)}', space=vmem, size = 0x12000, scoped, tag = 'internal scratch']
  %s0 = inlined_call_operand.hbm [shape: f32[1,2048], index: 0, kind: input, shape index: {}]
  %s1 = inlined_call_operand.hbm [shape: f32[1,2048], index: 1, kind: output, shape index: {}]
  %s2 = sld [smem:[#allocation0]]
  $region18: #{tpu_custom_call.1} parent=0
    _
  %s4 = ssub.s32 1, %s2
  %s5 = scalar_select 0, %s4, %s2
  $region1: #{tpu_custom_call.1} parent=0
    #allocation2 [shape = 'u8[8192]{0}', space=vmem, size = 0x2000, scoped, tag = 'input window, operand 0, single buffered']
    #allocation3 [shape = 's32[1]{0}', space=sflag, size = 0x4, scoped, tag = 'scoped memory for tpu_custom_call.1']
    #allocation4 [shape = 's32[1]{0}', space=sflag, size = 0x4, scoped, tag = 'scoped memory for tpu_custom_call.1']
    #allocation5 [shape = 'u8[8192]{0}', space=vmem, size = 0x2000, scoped, tag = 'output window, operand 0, single buffered']
    %6 = vsyncpa [#allocation3], 0
    %7 = vsyncpa [#allocation4], 0
    // Predicated region
    $region2: #{tpu_custom_call.1} parent=1 // pred_check
      _
    $region3: #{tpu_custom_call.1} parent=1 // pred_check_branch
      %9 = sbr.rel (0) target = $region5
    $region4: #{tpu_custom_call.1} parent=1 // pred_region
      %s11 = ssub.s32 256, 256
      %12 = vsyncadd [#allocation3], %s11
      %s14 = sshll.u32 [#allocation2], 4
      %s15 = int_to_ptr.vmem [resolvable:$true] %s14
      %17 = dma.hbm_to_vmem [thread:$0]  %s0, 256, %s15, [#allocation3]
    $region5: #{tpu_custom_call.1} parent=1 // pred_fallthru
      _
    // Predicated region
    $region6: #{tpu_custom_call.1} parent=1 // pred_check
      _
    $region7: #{tpu_custom_call.1} parent=1 // pred_check_branch
      %19 = sbr.rel (0) target = $region9
    $region8: #{tpu_custom_call.1} parent=1 // pred_region
      %20 = dma.done [#allocation3], 256
    $region9: #{tpu_custom_call.1} parent=1 // pred_fallthru
      _
    %v21 = vld [vmem:[#allocation2] sm:$0xff]
    %v22 = vld [vmem:[#allocation2 + $0x8] sm:$0xff]
    %23 = vst [vmem:[#allocation5] sm:$0xff] %v21
    %24 = vst [vmem:[#allocation5 + $0x8] sm:$0xff] %v22
    // Predicated region
    $region10: #{tpu_custom_call.1} parent=1 // pred_check
      _
    $region11: #{tpu_custom_call.1} parent=1 // pred_check_branch
      %26 = sbr.rel (0) target = $region13
    $region12: #{tpu_custom_call.1} parent=1 // pred_region
      %s28 = ssub.s32 256, 256
      %29 = vsyncadd [#allocation4], %s28
      %s31 = sshll.u32 [#allocation5], 4
      %s32 = int_to_ptr.vmem [resolvable:$true] %s31
      %34 = dma.vmem_to_hbm [thread:$0]  %s32, 256, %s1, [#allocation4]
    $region13: #{tpu_custom_call.1} parent=1 // pred_fallthru
      _
    // Predicated region
    $region14: #{tpu_custom_call.1} parent=1 // pred_check
      _
    $region15: #{tpu_custom_call.1} parent=1 // pred_check_branch
      %36 = sbr.rel (0) target = $region17
    $region16: #{tpu_custom_call.1} parent=1 // pred_region
      %37 = dma.done [#allocation4], 256
    $region17: #{tpu_custom_call.1} parent=1 // pred_fallthru
      _
    %38 = vsyncpa [#allocation3], 1
    %39 = vsyncpa [#allocation4], 1

</llo_original>
